<compile_context>
chip_gen: v6e
topology: v6e:2x2x1
jax: 0.10.0
libtpu: 0.0.40
codegen_flags: <defaults>
</compile_context>

<pallas_src>
import functools
import math

import jax
import jax.numpy as jnp
from jax.experimental import pallas as pl
from jax.experimental.pallas import tpu as pltpu


# ---------------------------------------------------------------------------
# Fused kernel: projection + memory attention (mean-commuted) + out linear
# ---------------------------------------------------------------------------
def _fused_kernel(x_ref, wqk_ref, bqk_ref, vwo_ref, bo_ref, out_ref,
                  *, n_mem, sqrt_fin):
    x = x_ref[...]                                                # (Bt, fin) f32

    # Fused Q/K projection: one bf16 MXU matmul against the concatenated,
    # s-major-permuted weight slab -> lane-dense (Bt, 2*n_mem*sqrt_fin), f32 acc.
    qk = jnp.dot(x.astype(jnp.bfloat16), wqk_ref[...],
                 preferred_element_type=jnp.float32)
    qk = jnp.maximum(qk + bqk_ref[...], 0.0)

    D = n_mem * sqrt_fin

    # Mean commuted through the matmuls:
    #   sum_i mem[b, i, j] ∝ (sum_i relu(Q)[b, i, :]) . relu(K)[b, j, :]
    # Each per-s slice below is a 128-lane-aligned, lane-dense (Bt, n_mem) tile;
    # the 8 lane reductions go to the XLU slot, the 8 broadcast-FMAs to the VPU
    # slot — both have slack under the MXU/DMA (do NOT reshape/vectorize this).
    m_acc = None
    for s in range(sqrt_fin):                                     # static unroll (s = 8)
        q_s = qk[:, s * n_mem:(s + 1) * n_mem]                    # relu(Q)[:, :, s]  (Bt, n_mem)
        k_s = qk[:, D + s * n_mem:D + (s + 1) * n_mem]            # relu(K)[:, :, s]  (Bt, n_mem)
        qsum_s = jnp.sum(q_s, axis=1, keepdims=True)              # (Bt, 1)
        term = qsum_s * k_s
        m_acc = term if m_acc is None else m_acc + term           # (Bt, n_mem)

    # Output linear + residual; scale/n_mem and V@Wo^T are pre-folded in vwo.
    y = jnp.dot(m_acc, vwo_ref[...], preferred_element_type=jnp.float32) + bo_ref[...]
    out_ref[...] = x + y


# ---------------------------------------------------------------------------
# Parameter prep: done ONCE (transposes / permutations / precomputed products)
# ---------------------------------------------------------------------------
def prepare_params(params, *, n_mem, weight_dtype=jnp.bfloat16):
    wq, bq = params["wq"], params["bq"]
    wk, bk = params["wk"], params["bk"]
    v, wo, bo = params["v"], params["wo"], params["bo"]

    D, fin = wq.shape
    sqrt_fin = D // n_mem
    assert sqrt_fin * n_mem == D
    scale = 1.0 / math.sqrt(sqrt_fin)

    # Permute projection output columns from m-major (m*sqrt_fin + s) to
    # s-major (s*n_mem + m) so the kernel sees n_mem=128 on the lane axis.
    def w_smajor(w):
        return w.reshape(n_mem, sqrt_fin, fin).transpose(1, 0, 2).reshape(D, fin)

    def b_smajor(b):
        return b.reshape(n_mem, sqrt_fin).T.reshape(D)

    wqk_t = jnp.concatenate([w_smajor(wq).T, w_smajor(wk).T], axis=1)   # (fin, 2D)
    bqk = jnp.concatenate([b_smajor(bq), b_smajor(bk)]).reshape(1, 2 * D)

    # Precompute (scale / n_mem) * V @ Wo^T : batch independent, weight-only.
    vwo = (scale / n_mem) * (v @ wo.T)                                  # (n_mem, fin) f32

    return {
        "wqk_t": wqk_t.astype(weight_dtype),   # (fin, 2*n_mem*sqrt_fin) bf16
        "bqk": bqk.astype(jnp.float32),        # (1,   2*n_mem*sqrt_fin)
        "vwo": vwo.astype(jnp.float32),        # (n_mem, fin) -- small, keep f32
        "bo": bo.reshape(1, -1).astype(jnp.float32),   # (1, fin)
    }


# ---------------------------------------------------------------------------
# Wrapper: batch-tiled grid (parallel), weight slabs VMEM-resident
# ---------------------------------------------------------------------------
def linear_residual_memory(x, prepped, *, n_mem, b_tile=None):
    B, fin = x.shape
    sqrt_fin = math.isqrt(fin)
    assert sqrt_fin * sqrt_fin == fin, "fin must be a perfect square"
    D = n_mem * sqrt_fin

    # Row-tile size: fill the MXU M dimension when B is large (256 on v6e/v7x,
    # 128 on v5e), fall back to full B for small batches.
    if b_tile is None:
        b_tile = min(B, 256)
    assert B % b_tile == 0, "B must be divisible by b_tile"
    n_tiles = B // b_tile

    kernel = functools.partial(_fused_kernel, n_mem=n_mem, sqrt_fin=sqrt_fin)

    row_spec = pl.BlockSpec((b_tile, fin), lambda i: (i, 0))         # tiled by rows
    full = lambda shape: pl.BlockSpec(shape, lambda i: (0,) * len(shape))

    # Cost estimate so XLA can schedule around the (tiny) custom call.
    flops = 2 * B * fin * (2 * D) + 2 * B * n_mem * fin
    bytes_accessed = (
        x.size * x.dtype.itemsize
        + B * fin * 4                                  # output
        + prepped["wqk_t"].size * prepped["wqk_t"].dtype.itemsize
        + prepped["bqk"].size * 4
        + prepped["vwo"].size * 4
        + prepped["bo"].size * 4)
    cost = pl.CostEstimate(flops=flops, transcendentals=0,
                           bytes_accessed=bytes_accessed)

    return pl.pallas_call(
        kernel,
        grid=(n_tiles,),
        in_specs=[
            row_spec,                # x                      (b_tile, fin)
            full((fin, 2 * D)),      # [Wq_perm^T | Wk_perm^T] bf16
            full((1, 2 * D)),        # [bq_perm   | bk_perm]
            full((n_mem, fin)),      # (scale/n_mem) * V @ Wo^T
            full((1, fin)),          # bo
        ],
        out_specs=row_spec,
        out_shape=jax.ShapeDtypeStruct((B, fin), jnp.float32),
        compiler_params=pltpu.CompilerParams(
            dimension_semantics=("parallel",)),        # v7x: 2nd TC takes half the row tiles
        cost_estimate=cost,
    )(x, prepped["wqk_t"], prepped["bqk"], prepped["vwo"], prepped["bo"])


# ---------------------------------------------------------------------------
# Pure-JAX reference (mirrors the PyTorch forward, eval mode)
# ---------------------------------------------------------------------------
def reference(x, params, *, n_mem):
    fin = x.shape[-1]
    sqrt_fin = math.isqrt(fin)
    B = x.shape[0]
    x_q = (x @ params["wq"].T + params["bq"]).reshape(B, n_mem, sqrt_fin)
    x_k = (x @ params["wk"].T + params["bk"]).reshape(B, n_mem, sqrt_fin)
    x_k = jnp.transpose(x_k, (0, 2, 1))
    mem = jnp.einsum("bis,bsj->bij",
                     jax.nn.relu(x_q), jax.nn.relu(x_k)) / math.sqrt(sqrt_fin)
    mem = jnp.einsum("bij,jf->bif", mem, params["v"])
    mem = mem.mean(axis=1)
    mem = mem @ params["wo"].T + params["bo"]
    return x + mem


def _bf16_round(a):
    return a.astype(jnp.bfloat16).astype(jnp.float32)


# ---------------------------------------------------------------------------
# Deterministic parameter init (shapes from the module's __init__)
# ---------------------------------------------------------------------------
def init_params(key, fin, n_mem):
    sqrt_fin = math.isqrt(fin)
    assert sqrt_fin * sqrt_fin == fin
    ks = jax.random.split(key, 7)
    bound = 1.0 / math.sqrt(fin)
    return {
        # nn.init.normal_ on q/k weights (std=1)
        "wq": jax.random.normal(ks[0], (sqrt_fin * n_mem, fin), jnp.float32),
        "bq": jax.random.uniform(ks[1], (sqrt_fin * n_mem,), jnp.float32,
                                 -bound, bound),
        "wk": jax.random.normal(ks[2], (sqrt_fin * n_mem, fin), jnp.float32),
        "bk": jax.random.uniform(ks[3], (sqrt_fin * n_mem,), jnp.float32,
                                 -bound, bound),
        # module inits v to zeros; use small random values so the kernel
        # compute path is exercised non-trivially (deterministic init).
        "v": 0.02 * jax.random.normal(ks[4], (n_mem, fin), jnp.float32),
        "wo": jax.random.uniform(ks[5], (fin, fin), jnp.float32, -bound, bound),
        "bo": jax.random.uniform(ks[6], (fin,), jnp.float32, -bound, bound),
    }


if __name__ == "__main__":
    B, FIN, N_MEM = 16, 64, 128   # sqrt_fin = 8; two 8-row tiles on the grid

    key = jax.random.PRNGKey(0)
    k_x, k_p = jax.random.split(key)
    x = jax.random.normal(k_x, (B, FIN), jnp.float32)
    params = init_params(k_p, FIN, N_MEM)

    prepped = prepare_params(params, n_mem=N_MEM)          # one-time weight prep
    out = linear_residual_memory(x, prepped, n_mem=N_MEM, b_tile=8)
    out = jax.block_until_ready(out)
    assert out.shape == (B, FIN)

    # Matched-precision reference: same bf16 rounding of x / Wq / Wk that the
    # kernel's MXU sees, rest of the math in f32 following the PyTorch forward.
    params_m = dict(params)
    params_m["wq"] = _bf16_round(params["wq"])
    params_m["wk"] = _bf16_round(params["wk"])
    ref_matched = reference(_bf16_round(x), params_m, n_mem=N_MEM)
    # Residual uses the exact (un-rounded) x in the kernel; align the check.
    ref_matched = ref_matched - _bf16_round(x) + x
    err = jnp.max(jnp.abs(out - ref_matched))
    assert jnp.allclose(out, ref_matched, rtol=2e-3, atol=2e-3), (
        f"max abs err vs matched-precision reference = {err}")

    # Loose sanity check against the pure-f32 reference (bf16 weight storage
    # intentionally relaxes this bound).
    ref_f32 = reference(x, params, n_mem=N_MEM)
    assert jnp.allclose(out, ref_f32, rtol=5e-2, atol=5e-2), (
        f"max abs err vs f32 reference = {jnp.max(jnp.abs(out - ref_f32))}")

    print("KERNEL_OK")
</pallas_src>

<mosaic_0001>
module attributes {stable_mosaic.version = 11 : i64} {
  func.func @_fused_kernel(%arg0: i32, %arg1: memref<8x64xf32, #tpu.memory_space<vmem>>, %arg2: memref<64x2048xbf16, #tpu.memory_space<vmem>>, %arg3: memref<1x2048xf32, #tpu.memory_space<vmem>>, %arg4: memref<128x64xf32, #tpu.memory_space<vmem>>, %arg5: memref<1x64xf32, #tpu.memory_space<vmem>>, %arg6: memref<8x64xf32, #tpu.memory_space<vmem>>) attributes {dimension_semantics = [#tpu.dimension_semantics<parallel>], iteration_bounds = array<i64: 2>, scalar_prefetch = 0 : i64, scratch_operands = 0 : i64, tpu.core_type = #tpu.core_type<tc>, window_params = [{transform_indices = @transform_0, window_bounds = array<i64: 8, 64>}, {pipeline_mode = #tpu.pipeline_mode<synchronous>, transform_indices = @transform_1, window_bounds = array<i64: 64, 2048>}, {pipeline_mode = #tpu.pipeline_mode<synchronous>, transform_indices = @transform_2, window_bounds = array<i64: 1, 2048>}, {pipeline_mode = #tpu.pipeline_mode<synchronous>, transform_indices = @transform_3, window_bounds = array<i64: 128, 64>}, {pipeline_mode = #tpu.pipeline_mode<synchronous>, transform_indices = @transform_4, window_bounds = array<i64: 1, 64>}, {transform_indices = @transform_5, window_bounds = array<i64: 8, 64>}]} {
    %c0 = arith.constant 0 : index
    %c0_0 = arith.constant 0 : index
    %0 = vector.load %arg1[%c0, %c0_0] : memref<8x64xf32, #tpu.memory_space<vmem>>, vector<8x64xf32>
    %1 = arith.truncf %0 : vector<8x64xf32> to vector<8x64xbf16>
    %c0_1 = arith.constant 0 : index
    %c0_2 = arith.constant 0 : index
    %2 = vector.load %arg2[%c0_1, %c0_2] : memref<64x2048xbf16, #tpu.memory_space<vmem>>, vector<64x2048xbf16>
    %cst = arith.constant dense<0.000000e+00> : vector<8x2048xf32>
    %3 = tpu.matmul %1, %2, %cst {dimension_numbers = #tpu.dot_dimension_numbers<[1], [0], [0], [1], [0, 0, 1, 1], [], []>} : vector<8x64xbf16>, vector<64x2048xbf16>, vector<8x2048xf32> -> vector<8x2048xf32>
    %c0_3 = arith.constant 0 : index
    %c0_4 = arith.constant 0 : index
    %4 = vector.load %arg3[%c0_3, %c0_4] : memref<1x2048xf32, #tpu.memory_space<vmem>>, vector<1x2048xf32>
    %5 = vector.broadcast %4 : vector<1x2048xf32> to vector<8x2048xf32>
    %6 = arith.addf %3, %5 : vector<8x2048xf32>
    %cst_5 = arith.constant 0.000000e+00 : f32
    %7 = vector.broadcast %cst_5 : f32 to vector<8x2048xf32>
    %8 = arith.maximumf %6, %7 : vector<8x2048xf32>
    %9 = vector.extract_strided_slice %8 {offsets = [0, 0], sizes = [8, 128], strides = [1, 1]} : vector<8x2048xf32> to vector<8x128xf32>
    %10 = vector.extract_strided_slice %8 {offsets = [0, 1024], sizes = [8, 128], strides = [1, 1]} : vector<8x2048xf32> to vector<8x128xf32>
    %cst_6 = arith.constant dense<0.000000e+00> : vector<8xf32>
    %11 = vector.multi_reduction <add>, %9, %cst_6 [1] : vector<8x128xf32> to vector<8xf32>
    %12 = vector.shape_cast %11 : vector<8xf32> to vector<8x1xf32>
    %13 = vector.broadcast %12 : vector<8x1xf32> to vector<8x128xf32>
    %14 = arith.mulf %13, %10 : vector<8x128xf32>
    %15 = vector.extract_strided_slice %8 {offsets = [0, 128], sizes = [8, 128], strides = [1, 1]} : vector<8x2048xf32> to vector<8x128xf32>
    %16 = vector.extract_strided_slice %8 {offsets = [0, 1152], sizes = [8, 128], strides = [1, 1]} : vector<8x2048xf32> to vector<8x128xf32>
    %cst_7 = arith.constant dense<0.000000e+00> : vector<8xf32>
    %17 = vector.multi_reduction <add>, %15, %cst_7 [1] : vector<8x128xf32> to vector<8xf32>
    %18 = vector.shape_cast %17 : vector<8xf32> to vector<8x1xf32>
    %19 = vector.broadcast %18 : vector<8x1xf32> to vector<8x128xf32>
    %20 = arith.mulf %19, %16 : vector<8x128xf32>
    %21 = arith.addf %14, %20 : vector<8x128xf32>
    %22 = vector.extract_strided_slice %8 {offsets = [0, 256], sizes = [8, 128], strides = [1, 1]} : vector<8x2048xf32> to vector<8x128xf32>
    %23 = vector.extract_strided_slice %8 {offsets = [0, 1280], sizes = [8, 128], strides = [1, 1]} : vector<8x2048xf32> to vector<8x128xf32>
    %cst_8 = arith.constant dense<0.000000e+00> : vector<8xf32>
    %24 = vector.multi_reduction <add>, %22, %cst_8 [1] : vector<8x128xf32> to vector<8xf32>
    %25 = vector.shape_cast %24 : vector<8xf32> to vector<8x1xf32>
    %26 = vector.broadcast %25 : vector<8x1xf32> to vector<8x128xf32>
    %27 = arith.mulf %26, %23 : vector<8x128xf32>
    %28 = arith.addf %21, %27 : vector<8x128xf32>
    %29 = vector.extract_strided_slice %8 {offsets = [0, 384], sizes = [8, 128], strides = [1, 1]} : vector<8x2048xf32> to vector<8x128xf32>
    %30 = vector.extract_strided_slice %8 {offsets = [0, 1408], sizes = [8, 128], strides = [1, 1]} : vector<8x2048xf32> to vector<8x128xf32>
    %cst_9 = arith.constant dense<0.000000e+00> : vector<8xf32>
    %31 = vector.multi_reduction <add>, %29, %cst_9 [1] : vector<8x128xf32> to vector<8xf32>
    %32 = vector.shape_cast %31 : vector<8xf32> to vector<8x1xf32>
    %33 = vector.broadcast %32 : vector<8x1xf32> to vector<8x128xf32>
    %34 = arith.mulf %33, %30 : vector<8x128xf32>
    %35 = arith.addf %28, %34 : vector<8x128xf32>
    %36 = vector.extract_strided_slice %8 {offsets = [0, 512], sizes = [8, 128], strides = [1, 1]} : vector<8x2048xf32> to vector<8x128xf32>
    %37 = vector.extract_strided_slice %8 {offsets = [0, 1536], sizes = [8, 128], strides = [1, 1]} : vector<8x2048xf32> to vector<8x128xf32>
    %cst_10 = arith.constant dense<0.000000e+00> : vector<8xf32>
    %38 = vector.multi_reduction <add>, %36, %cst_10 [1] : vector<8x128xf32> to vector<8xf32>
    %39 = vector.shape_cast %38 : vector<8xf32> to vector<8x1xf32>
    %40 = vector.broadcast %39 : vector<8x1xf32> to vector<8x128xf32>
    %41 = arith.mulf %40, %37 : vector<8x128xf32>
    %42 = arith.addf %35, %41 : vector<8x128xf32>
    %43 = vector.extract_strided_slice %8 {offsets = [0, 640], sizes = [8, 128], strides = [1, 1]} : vector<8x2048xf32> to vector<8x128xf32>
    %44 = vector.extract_strided_slice %8 {offsets = [0, 1664], sizes = [8, 128], strides = [1, 1]} : vector<8x2048xf32> to vector<8x128xf32>
    %cst_11 = arith.constant dense<0.000000e+00> : vector<8xf32>
    %45 = vector.multi_reduction <add>, %43, %cst_11 [1] : vector<8x128xf32> to vector<8xf32>
    %46 = vector.shape_cast %45 : vector<8xf32> to vector<8x1xf32>
    %47 = vector.broadcast %46 : vector<8x1xf32> to vector<8x128xf32>
    %48 = arith.mulf %47, %44 : vector<8x128xf32>
    %49 = arith.addf %42, %48 : vector<8x128xf32>
    %50 = vector.extract_strided_slice %8 {offsets = [0, 768], sizes = [8, 128], strides = [1, 1]} : vector<8x2048xf32> to vector<8x128xf32>
    %51 = vector.extract_strided_slice %8 {offsets = [0, 1792], sizes = [8, 128], strides = [1, 1]} : vector<8x2048xf32> to vector<8x128xf32>
    %cst_12 = arith.constant dense<0.000000e+00> : vector<8xf32>
    %52 = vector.multi_reduction <add>, %50, %cst_12 [1] : vector<8x128xf32> to vector<8xf32>
    %53 = vector.shape_cast %52 : vector<8xf32> to vector<8x1xf32>
    %54 = vector.broadcast %53 : vector<8x1xf32> to vector<8x128xf32>
    %55 = arith.mulf %54, %51 : vector<8x128xf32>
    %56 = arith.addf %49, %55 : vector<8x128xf32>
    %57 = vector.extract_strided_slice %8 {offsets = [0, 896], sizes = [8, 128], strides = [1, 1]} : vector<8x2048xf32> to vector<8x128xf32>
    %58 = vector.extract_strided_slice %8 {offsets = [0, 1920], sizes = [8, 128], strides = [1, 1]} : vector<8x2048xf32> to vector<8x128xf32>
    %cst_13 = arith.constant dense<0.000000e+00> : vector<8xf32>
    %59 = vector.multi_reduction <add>, %57, %cst_13 [1] : vector<8x128xf32> to vector<8xf32>
    %60 = vector.shape_cast %59 : vector<8xf32> to vector<8x1xf32>
    %61 = vector.broadcast %60 : vector<8x1xf32> to vector<8x128xf32>
    %62 = arith.mulf %61, %58 : vector<8x128xf32>
    %63 = arith.addf %56, %62 : vector<8x128xf32>
    %c0_14 = arith.constant 0 : index
    %c0_15 = arith.constant 0 : index
    %64 = vector.load %arg4[%c0_14, %c0_15] : memref<128x64xf32, #tpu.memory_space<vmem>>, vector<128x64xf32>
    %cst_16 = arith.constant dense<0.000000e+00> : vector<8x64xf32>
    %65 = tpu.matmul %63, %64, %cst_16 {dimension_numbers = #tpu.dot_dimension_numbers<[1], [0], [0], [1], [0, 0, 1, 1], [], []>} : vector<8x128xf32>, vector<128x64xf32>, vector<8x64xf32> -> vector<8x64xf32>
    %c0_17 = arith.constant 0 : index
    %c0_18 = arith.constant 0 : index
    %66 = vector.load %arg5[%c0_17, %c0_18] : memref<1x64xf32, #tpu.memory_space<vmem>>, vector<1x64xf32>
    %67 = vector.broadcast %66 : vector<1x64xf32> to vector<8x64xf32>
    %68 = arith.addf %65, %67 : vector<8x64xf32>
    %69 = arith.addf %0, %68 : vector<8x64xf32>
    %c0_19 = arith.constant 0 : index
    %c0_20 = arith.constant 0 : index
    %70 = vector.load %arg6[%c0_19, %c0_20] : memref<8x64xf32, #tpu.memory_space<vmem>>, vector<8x64xf32>
    tpu.vector_store %arg6[%c0_19, %c0_20], %69 {strides = array<i32>} : memref<8x64xf32, #tpu.memory_space<vmem>>, vector<8x64xf32>,
    return
  }
  func.func @transform_0(%arg0: i32) -> (i32, i32) {
    %c0_i32 = arith.constant 0 : i32
    %c0_i32_0 = arith.constant 0 : i32
    return %arg0, %c0_i32 : i32, i32
  }
  func.func @transform_1(%arg0: i32) -> (i32, i32) {
    %c0_i32 = arith.constant 0 : i32
    %c0_i32_0 = arith.constant 0 : i32
    %c0_i32_1 = arith.constant 0 : i32
    return %c0_i32, %c0_i32_0 : i32, i32
  }
  func.func @transform_2(%arg0: i32) -> (i32, i32) {
    %c0_i32 = arith.constant 0 : i32
    %c0_i32_0 = arith.constant 0 : i32
    %c0_i32_1 = arith.constant 0 : i32
    return %c0_i32, %c0_i32_0 : i32, i32
  }
  func.func @transform_3(%arg0: i32) -> (i32, i32) {
    %c0_i32 = arith.constant 0 : i32
    %c0_i32_0 = arith.constant 0 : i32
    %c0_i32_1 = arith.constant 0 : i32
    return %c0_i32, %c0_i32_0 : i32, i32
  }
  func.func @transform_4(%arg0: i32) -> (i32, i32) {
    %c0_i32 = arith.constant 0 : i32
    %c0_i32_0 = arith.constant 0 : i32
    %c0_i32_1 = arith.constant 0 : i32
    return %c0_i32, %c0_i32_0 : i32, i32
  }
  func.func @transform_5(%arg0: i32) -> (i32, i32) {
    %c0_i32 = arith.constant 0 : i32
    %c0_i32_0 = arith.constant 0 : i32
    return %arg0, %c0_i32 : i32, i32
  }
}

</mosaic_0001>

<llo_original>
// kernel: tpu_custom_call.1
$region0: #{tpu_custom_call.1}
  #allocation0 [shape = 'u32[]', space=smem, size = 0x4, offset = 0x4, fixed_abs, tag = 'smem constant byte address 0x4 - core index']
  #allocation1 [shape = 'u32[144,128]{1,0:T(1,128)}', space=vmem, size = 0x12000, scoped, tag = 'internal scratch']
  %s0 = inlined_call_operand.vmem [shape: f32[16,64], index: 0, kind: input, shape index: {}]
  %s1 = inlined_call_operand.hbm [shape: bf16[64,2048], index: 1, kind: input, shape index: {}]
  %s2 = inlined_call_operand.vmem [shape: f32[1,2048], index: 2, kind: input, shape index: {}]
  %s3 = inlined_call_operand.vmem [shape: f32[128,64], index: 3, kind: input, shape index: {}]
  %s4 = inlined_call_operand.vmem [shape: f32[1,64], index: 4, kind: input, shape index: {}]
  %s5 = inlined_call_operand.hbm [shape: f32[16,64], index: 5, kind: output, shape index: {}]
  %s6 = sld [smem:[#allocation0]]
  $region57: #{tpu_custom_call.1} parent=0
    _
  %s8 = ssub.s32 1, %s6
  %s9 = scalar_select 0, %s8, %s6
  $region1: #{tpu_custom_call.1} parent=0
    #allocation2 [shape = 'u8[262144]{0}', space=vmem, size = 0x40000, scoped, tag = 'input window, operand 1, single buffered']
    #allocation3 [shape = 's32[2]{0}', space=sflag, size = 0x8, scoped, tag = 'scoped memory for tpu_custom_call.1']
    #allocation4 [shape = 's32[2]{0}', space=sflag, size = 0x8, scoped, tag = 'scoped memory for tpu_custom_call.1']
    #allocation5 [shape = 'u8[8192]{0}', space=vmem, size = 0x2000, scoped, tag = 'output window, operand 0']
    %10 = vsyncpa [#allocation3], 0
    %11 = vsyncpa [#allocation4], 0
    %s12 = scalar_lea.sflag [#allocation4], 1
    %13 = vsyncpa %s12, 0
    loop: start=0, step=1, limit=4
    $region2: #{tpu_custom_call.1} parent=1 // loop_pre_header
      _
    $region3: #{tpu_custom_call.1} parent=1 // loop_header
      %s15 = sphi 0, %s19
      %p16 = scmp.ge.s32.totalorder %s15, 4
      %s25 = sphi 0, %s27
      %s28 = sphi 0, %s25
      %s29 = sphi 0, %s28
      %s45 = sphi 0, %s29
      %s49 = sphi 0, %s49
      %s51 = sphi 0, %s49
      %s52 = sphi 0, %s51
      %s66 = sphi 0, %s52
      %s70 = sphi 0, %s70
      %s72 = sphi 0, %s70
      %s73 = sphi 0, %s72
      %s87 = sphi 0, %s73
      %s91 = sphi 0, %s91
      %s93 = sphi 0, %s91
      %s94 = sphi 0, %s93
      %s108 = sphi 0, %s94
      %s112 = sphi 0, %s112
      %s114 = sphi 0, %s112
      %s115 = sphi 0, %s114
      %s129 = sphi 0, %s115
      %s135 = sphi 0, %s137
      %s138 = sphi 0, %s135
      %s139 = sphi 0, %s138
      %s155 = sphi 0, %s139
    $region4: #{tpu_custom_call.1} parent=1 // loop_header_branch
      %18 = sbr.rel (%p16) target = $region8
    $region5: #{tpu_custom_call.1} parent=1 // loop_body
      %s20 = ssub.s32 %s15, 1
      %s21 = ssub.s32 %s15, 2
      %s22 = sadd.s32 %s15, 1
      %s23 = ssub.s32 %s15, %s22
      %p24 = scmp.eq.s32.totalorder %s23, 0
      %s26 = sadd.s32 %s25, 1
      %s27 = scalar_select %p24, %s25, %s26
      %p30 = pneg %p24
      %p31 = scmp.eq.s32.totalorder %s15, 1
      %p32 = por %p30, %p31
      %p33 = scmp.ne.s32.totalorder %s25, %s28
      %p34 = scmp.eq.s32.totalorder %s15, 0
      %p35 = por %p33, %p34
      %p36 = scmp.ne.s32.totalorder %s25, %s28
      %p37 = scmp.eq.s32.totalorder %s20, 1
      %p38 = por %p36, %p37
      %p39 = scmp.ne.s32.totalorder %s28, %s29
      %p40 = scmp.eq.s32.totalorder %s20, 0
      %p41 = por %p39, %p40
      %p42 = scmp.ne.s32.totalorder %s28, %s29
      %p43 = scmp.eq.s32.totalorder %s21, 1
      %p44 = por %p42, %p43
      %p46 = scmp.ne.s32.totalorder %s29, %s45
      %p47 = scmp.eq.s32.totalorder %s21, 0
      %p48 = por %p46, %p47
      %s50 = sadd.s32 %s49, 1
      %p53 = scmp.eq.s32.totalorder %s15, 1
      %p54 = scmp.ne.s32.totalorder %s49, %s51
      %p55 = scmp.eq.s32.totalorder %s15, 0
      %p56 = por %p54, %p55
      %p57 = scmp.ne.s32.totalorder %s49, %s51
      %p58 = scmp.eq.s32.totalorder %s20, 1
      %p59 = por %p57, %p58
      %p60 = scmp.ne.s32.totalorder %s51, %s52
      %p61 = scmp.eq.s32.totalorder %s20, 0
      %p62 = por %p60, %p61
      %p63 = scmp.ne.s32.totalorder %s51, %s52
      %p64 = scmp.eq.s32.totalorder %s21, 1
      %p65 = por %p63, %p64
      %p67 = scmp.ne.s32.totalorder %s52, %s66
      %p68 = scmp.eq.s32.totalorder %s21, 0
      %p69 = por %p67, %p68
      %s71 = sadd.s32 %s70, 1
      %p74 = scmp.eq.s32.totalorder %s15, 1
      %p75 = scmp.ne.s32.totalorder %s70, %s72
      %p76 = scmp.eq.s32.totalorder %s15, 0
      %p77 = por %p75, %p76
      %p78 = scmp.ne.s32.totalorder %s70, %s72
      %p79 = scmp.eq.s32.totalorder %s20, 1
      %p80 = por %p78, %p79
      %p81 = scmp.ne.s32.totalorder %s72, %s73
      %p82 = scmp.eq.s32.totalorder %s20, 0
      %p83 = por %p81, %p82
      %p84 = scmp.ne.s32.totalorder %s72, %s73
      %p85 = scmp.eq.s32.totalorder %s21, 1
      %p86 = por %p84, %p85
      %p88 = scmp.ne.s32.totalorder %s73, %s87
      %p89 = scmp.eq.s32.totalorder %s21, 0
      %p90 = por %p88, %p89
      %s92 = sadd.s32 %s91, 1
      %p95 = scmp.eq.s32.totalorder %s15, 1
      %p96 = scmp.ne.s32.totalorder %s91, %s93
      %p97 = scmp.eq.s32.totalorder %s15, 0
      %p98 = por %p96, %p97
      %p99 = scmp.ne.s32.totalorder %s91, %s93
      %p100 = scmp.eq.s32.totalorder %s20, 1
      %p101 = por %p99, %p100
      %p102 = scmp.ne.s32.totalorder %s93, %s94
      %p103 = scmp.eq.s32.totalorder %s20, 0
      %p104 = por %p102, %p103
      %p105 = scmp.ne.s32.totalorder %s93, %s94
      %p106 = scmp.eq.s32.totalorder %s21, 1
      %p107 = por %p105, %p106
      %p109 = scmp.ne.s32.totalorder %s94, %s108
      %p110 = scmp.eq.s32.totalorder %s21, 0
      %p111 = por %p109, %p110
      %s113 = sadd.s32 %s112, 1
      %p116 = scmp.eq.s32.totalorder %s15, 1
      %p117 = scmp.ne.s32.totalorder %s112, %s114
      %p118 = scmp.eq.s32.totalorder %s15, 0
      %p119 = por %p117, %p118
      %p120 = scmp.ne.s32.totalorder %s112, %s114
      %p121 = scmp.eq.s32.totalorder %s20, 1
      %p122 = por %p120, %p121
      %p123 = scmp.ne.s32.totalorder %s114, %s115
      %p124 = scmp.eq.s32.totalorder %s20, 0
      %p125 = por %p123, %p124
      %p126 = scmp.ne.s32.totalorder %s114, %s115
      %p127 = scmp.eq.s32.totalorder %s21, 1
      %p128 = por %p126, %p127
      %p130 = scmp.ne.s32.totalorder %s115, %s129
      %p131 = scmp.eq.s32.totalorder %s21, 0
      %p132 = por %p130, %p131
      %s133 = ssub.s32 %s15, %s22
      %p134 = scmp.eq.s32.totalorder %s133, 0
      %s136 = sadd.s32 %s135, 1
      %s137 = scalar_select %p134, %s135, %s136
      %p140 = pneg %p134
      %p141 = scmp.eq.s32.totalorder %s15, 1
      %p142 = por %p140, %p141
      %p143 = scmp.ne.s32.totalorder %s135, %s138
      %p144 = scmp.eq.s32.totalorder %s15, 0
      %p145 = por %p143, %p144
      %p146 = scmp.ne.s32.totalorder %s135, %s138
      %p147 = scmp.eq.s32.totalorder %s20, 1
      %p148 = por %p146, %p147
      %p149 = scmp.ne.s32.totalorder %s138, %s139
      %p150 = scmp.eq.s32.totalorder %s20, 0
      %p151 = por %p149, %p150
      %p152 = scmp.ne.s32.totalorder %s138, %s139
      %p153 = scmp.eq.s32.totalorder %s21, 1
      %p154 = por %p152, %p153
      %p156 = scmp.ne.s32.totalorder %s139, %s155
      %p157 = scmp.eq.s32.totalorder %s21, 0
      %p158 = por %p156, %p157
      %p159 = scmp.le.s32.totalorder 1, %s15
      %p160 = scmp.lt.s32.totalorder %s15, 3
      %p161 = pnand %p159, %p160
      %p162 = pneg %p161
      // Predicated region
      $region9: #{tpu_custom_call.1} parent=5 // pred_check
        _
      $region10: #{tpu_custom_call.1} parent=5 // pred_check_branch
        %164 = sbr.rel (%p161) target = $region12
      $region11: #{tpu_custom_call.1} parent=5 // pred_region
        %s165 = ssub.s32 %s15, 1
        // Predicated region
        $region13: #{tpu_custom_call.1} parent=11 // pred_check
          %p166 = pneg %p62
        $region14: #{tpu_custom_call.1} parent=11 // pred_check_branch
          %168 = sbr.rel (%p166) target = $region16
        $region15: #{tpu_custom_call.1} parent=11 // pred_region
          %s170 = ssub.s32 8192, 8192
          %171 = vsyncadd [#allocation3], %s170
          %s172 = sshll.u32 [#allocation2], 4
          %s173 = int_to_ptr.vmem [resolvable:$true] %s172
          %178 = dma.hbm_to_vmem [thread:$0]  %s1, 8192, %s173, [#allocation3], 1024, 1024, 64
        $region16: #{tpu_custom_call.1} parent=11 // pred_fallthru
          _
        // Predicated region
        $region17: #{tpu_custom_call.1} parent=11 // pred_check
          %p179 = pneg %p83
        $region18: #{tpu_custom_call.1} parent=11 // pred_check_branch
          %181 = sbr.rel (%p179) target = $region20
        $region19: #{tpu_custom_call.1} parent=11 // pred_region
          _
        $region20: #{tpu_custom_call.1} parent=11 // pred_fallthru
          _
        // Predicated region
        $region21: #{tpu_custom_call.1} parent=11 // pred_check
          %p182 = pneg %p104
        $region22: #{tpu_custom_call.1} parent=11 // pred_check_branch
          %184 = sbr.rel (%p182) target = $region24
        $region23: #{tpu_custom_call.1} parent=11 // pred_region
          _
        $region24: #{tpu_custom_call.1} parent=11 // pred_fallthru
          _
        // Predicated region
        $region25: #{tpu_custom_call.1} parent=11 // pred_check
          %p185 = pneg %p125
        $region26: #{tpu_custom_call.1} parent=11 // pred_check_branch
          %187 = sbr.rel (%p185) target = $region28
        $region27: #{tpu_custom_call.1} parent=11 // pred_region
          _
        $region28: #{tpu_custom_call.1} parent=11 // pred_fallthru
          _
      $region12: #{tpu_custom_call.1} parent=5 // pred_fallthru
        _
      %p188 = scmp.lt.s32.totalorder %s15, 2
      // Predicated region
      $region29: #{tpu_custom_call.1} parent=5 // pred_check
        %p189 = pneg %p188
      $region30: #{tpu_custom_call.1} parent=5 // pred_check_branch
        %191 = sbr.rel (%p189) target = $region32
      $region31: #{tpu_custom_call.1} parent=5 // pred_region
        // Predicated region
        $region33: #{tpu_custom_call.1} parent=31 // pred_check
          %p192 = pneg %p35
        $region34: #{tpu_custom_call.1} parent=31 // pred_check_branch
          %194 = sbr.rel (%p192) target = $region36
        $region35: #{tpu_custom_call.1} parent=31 // pred_region
          %p195 = scmp.lt.s32.totalorder %s15, 1
          %s196 = scalar_select %p195, %s15, 1
          %s197 = smul.addr %s196, 8
          %s198 = scalar_lea.vmem %s0, %s197
        $region36: #{tpu_custom_call.1} parent=31 // pred_fallthru
          _
      $region32: #{tpu_custom_call.1} parent=5 // pred_fallthru
        _
      %p199 = scmp.le.s32.totalorder 1, %s15
      %p200 = scmp.lt.s32.totalorder %s15, 3
      %p201 = pnand %p199, %p200
      %p202 = pneg %p201
      // Predicated region
      $region37: #{tpu_custom_call.1} parent=5 // pred_check
        _
      $region38: #{tpu_custom_call.1} parent=5 // pred_check_branch
        %204 = sbr.rel (%p201) target = $region40
      $region39: #{tpu_custom_call.1} parent=5 // pred_region
        %s205 = ssub.s32 %s15, 1
        // Predicated region
        $region41: #{tpu_custom_call.1} parent=39 // pred_check
          %p206 = pneg %p62
        $region42: #{tpu_custom_call.1} parent=39 // pred_check_branch
          %208 = sbr.rel (%p206) target = $region44
        $region43: #{tpu_custom_call.1} parent=39 // pred_region
          %209 = dma.done [#allocation3], 8192
        $region44: #{tpu_custom_call.1} parent=39 // pred_fallthru
          _
        %p210 = scmp.lt.s32.totalorder %s20, 1
        %s211 = scalar_select %p210, %s20, 1
        %s212 = smul.addr %s211, 8
        %s213 = scalar_lea.vmem %s0, %s212
        %p214 = pneg %p41
        %p215 = pneg %p38
        %p216 = pneg %p62
        %p217 = pneg %p59
        %p218 = pneg %p83
        %p219 = pneg %p80
        %p220 = pneg %p104
        %p221 = pneg %p101
        %p222 = pneg %p125
        %p223 = pneg %p122
        %p224 = pneg %p151
        %p225 = pneg %p148
        %s226 = sand.u32 %s138, 1
        %s227 = scalar_lea.sflag [#allocation4], %s226
        %s228 = sand.u32 %s138, 1
        %s229 = smul.addr %s228, 8
        %s230 = scalar_lea.vmem [#allocation5], %s229
        %p231 = scmp.lt.s32.totalorder %s20, 1
        %s232 = scalar_select %p231, %s20, 1
        %s233 = smul.addr %s232, 8
        %s234 = scalar_lea.vmem %s0, %s233
        %v236 = vld [vmem:[%s234] sm:$0xff]
        %v237 = vpack.c.bf16 %v236, %v236
        %v238 = vld [vmem:[#allocation2] sm:$0xff]
        %v239 = vld [vmem:[#allocation2 + $0x8] sm:$0xff]
        %v240 = vld [vmem:[#allocation2 + $0x10] sm:$0xff]
        %v241 = vld [vmem:[#allocation2 + $0x18] sm:$0xff]
        %v242 = vld [vmem:[#allocation2 + $0x20] sm:$0xff]
        %v243 = vld [vmem:[#allocation2 + $0x28] sm:$0xff]
        %v244 = vld [vmem:[#allocation2 + $0x30] sm:$0xff]
        %v245 = vld [vmem:[#allocation2 + $0x38] sm:$0xff]
        %v246 = vld [vmem:[#allocation2 + $0x40] sm:$0xff]
        %v247 = vld [vmem:[#allocation2 + $0x48] sm:$0xff]
        %v248 = vld [vmem:[#allocation2 + $0x50] sm:$0xff]
        %v249 = vld [vmem:[#allocation2 + $0x58] sm:$0xff]
        %v250 = vld [vmem:[#allocation2 + $0x60] sm:$0xff]
        %v251 = vld [vmem:[#allocation2 + $0x68] sm:$0xff]
        %v252 = vld [vmem:[#allocation2 + $0x70] sm:$0xff]
        %v253 = vld [vmem:[#allocation2 + $0x78] sm:$0xff]
        %v254 = vld [vmem:[#allocation2 + $0x80] sm:$0xff]
        %v255 = vld [vmem:[#allocation2 + $0x88] sm:$0xff]
        %v256 = vld [vmem:[#allocation2 + $0x90] sm:$0xff]
        %v257 = vld [vmem:[#allocation2 + $0x98] sm:$0xff]
        %v258 = vld [vmem:[#allocation2 + $0xa0] sm:$0xff]
        %v259 = vld [vmem:[#allocation2 + $0xa8] sm:$0xff]
        %v260 = vld [vmem:[#allocation2 + $0xb0] sm:$0xff]
        %v261 = vld [vmem:[#allocation2 + $0xb8] sm:$0xff]
        %v262 = vld [vmem:[#allocation2 + $0xc0] sm:$0xff]
        %v263 = vld [vmem:[#allocation2 + $0xc8] sm:$0xff]
        %v264 = vld [vmem:[#allocation2 + $0xd0] sm:$0xff]
        %v265 = vld [vmem:[#allocation2 + $0xd8] sm:$0xff]
        %v266 = vld [vmem:[#allocation2 + $0xe0] sm:$0xff]
        %v267 = vld [vmem:[#allocation2 + $0xe8] sm:$0xff]
        %v268 = vld [vmem:[#allocation2 + $0xf0] sm:$0xff]
        %v269 = vld [vmem:[#allocation2 + $0xf8] sm:$0xff]
        %v270 = vld [vmem:[#allocation2 + $0x100] sm:$0xff]
        %v271 = vld [vmem:[#allocation2 + $0x108] sm:$0xff]
        %v272 = vld [vmem:[#allocation2 + $0x110] sm:$0xff]
        %v273 = vld [vmem:[#allocation2 + $0x118] sm:$0xff]
        %v274 = vld [vmem:[#allocation2 + $0x120] sm:$0xff]
        %v275 = vld [vmem:[#allocation2 + $0x128] sm:$0xff]
        %v276 = vld [vmem:[#allocation2 + $0x130] sm:$0xff]
        %v277 = vld [vmem:[#allocation2 + $0x138] sm:$0xff]
        %v278 = vld [vmem:[#allocation2 + $0x140] sm:$0xff]
        %v279 = vld [vmem:[#allocation2 + $0x148] sm:$0xff]
        %v280 = vld [vmem:[#allocation2 + $0x150] sm:$0xff]
        %v281 = vld [vmem:[#allocation2 + $0x158] sm:$0xff]
        %v282 = vld [vmem:[#allocation2 + $0x160] sm:$0xff]
        %v283 = vld [vmem:[#allocation2 + $0x168] sm:$0xff]
        %v284 = vld [vmem:[#allocation2 + $0x170] sm:$0xff]
        %v285 = vld [vmem:[#allocation2 + $0x178] sm:$0xff]
        %v286 = vld [vmem:[#allocation2 + $0x180] sm:$0xff]
        %v287 = vld [vmem:[#allocation2 + $0x188] sm:$0xff]
        %v288 = vld [vmem:[#allocation2 + $0x190] sm:$0xff]
        %v289 = vld [vmem:[#allocation2 + $0x198] sm:$0xff]
        %v290 = vld [vmem:[#allocation2 + $0x1a0] sm:$0xff]
        %v291 = vld [vmem:[#allocation2 + $0x1a8] sm:$0xff]
        %v292 = vld [vmem:[#allocation2 + $0x1b0] sm:$0xff]
        %v293 = vld [vmem:[#allocation2 + $0x1b8] sm:$0xff]
        %v294 = vld [vmem:[#allocation2 + $0x1c0] sm:$0xff]
        %v295 = vld [vmem:[#allocation2 + $0x1c8] sm:$0xff]
        %v296 = vld [vmem:[#allocation2 + $0x1d0] sm:$0xff]
        %v297 = vld [vmem:[#allocation2 + $0x1d8] sm:$0xff]
        %v298 = vld [vmem:[#allocation2 + $0x1e0] sm:$0xff]
        %v299 = vld [vmem:[#allocation2 + $0x1e8] sm:$0xff]
        %v300 = vld [vmem:[#allocation2 + $0x1f0] sm:$0xff]
        %v301 = vld [vmem:[#allocation2 + $0x1f8] sm:$0xff]
        %v302 = vld [vmem:[%s2] sm:$0xff]
        %v303 = vld [vmem:[%s2 + $0x8] sm:$0xff]
        %v306 = vlaneseq
        %v307 = vshrl.u32 %v306, 7
        %v308 = vsub.s32 0, %v307
        %v309 = vrot.slane %v302, %v308
        %v310 = vlaneseq
        %v311 = vshrl.u32 %v310, 7
        %v312 = vsub.s32 1, %v311
        %v313 = vrot.slane %v302, %v312
        %v314 = vlaneseq
        %v315 = vshrl.u32 %v314, 7
        %v316 = vsub.s32 2, %v315
        %v317 = vrot.slane %v302, %v316
        %v318 = vlaneseq
        %v319 = vshrl.u32 %v318, 7
        %v320 = vsub.s32 3, %v319
        %v321 = vrot.slane %v302, %v320
        %v322 = vlaneseq
        %v323 = vshrl.u32 %v322, 7
        %v324 = vsub.s32 4, %v323
        %v325 = vrot.slane %v302, %v324
        %v326 = vlaneseq
        %v327 = vshrl.u32 %v326, 7
        %v328 = vsub.s32 5, %v327
        %v329 = vrot.slane %v302, %v328
        %v330 = vlaneseq
        %v331 = vshrl.u32 %v330, 7
        %v332 = vsub.s32 6, %v331
        %v333 = vrot.slane %v302, %v332
        %v334 = vlaneseq
        %v335 = vshrl.u32 %v334, 7
        %v336 = vsub.s32 7, %v335
        %v337 = vrot.slane %v302, %v336
        %v338 = vlaneseq
        %v339 = vshrl.u32 %v338, 7
        %v340 = vsub.s32 0, %v339
        %v341 = vrot.slane %v303, %v340
        %v342 = vlaneseq
        %v343 = vshrl.u32 %v342, 7
        %v344 = vsub.s32 1, %v343
        %v345 = vrot.slane %v303, %v344
        %v346 = vlaneseq
        %v347 = vshrl.u32 %v346, 7
        %v348 = vsub.s32 2, %v347
        %v349 = vrot.slane %v303, %v348
        %v350 = vlaneseq
        %v351 = vshrl.u32 %v350, 7
        %v352 = vsub.s32 3, %v351
        %v353 = vrot.slane %v303, %v352
        %v354 = vlaneseq
        %v355 = vshrl.u32 %v354, 7
        %v356 = vsub.s32 4, %v355
        %v357 = vrot.slane %v303, %v356
        %v358 = vlaneseq
        %v359 = vshrl.u32 %v358, 7
        %v360 = vsub.s32 5, %v359
        %v361 = vrot.slane %v303, %v360
        %v362 = vlaneseq
        %v363 = vshrl.u32 %v362, 7
        %v364 = vsub.s32 6, %v363
        %v365 = vrot.slane %v303, %v364
        %v366 = vlaneseq
        %v367 = vshrl.u32 %v366, 7
        %v368 = vsub.s32 7, %v367
        %v369 = vrot.slane %v303, %v368
        %v450 = vunpack.c.l.b16 %v238
        %v451 = vunpack.c.h.b16 %v238
        %v452 = vunpack.c.l.b16 %v239
        %v453 = vunpack.c.h.b16 %v239
        %v454 = vunpack.c.l.b16 %v240
        %v455 = vunpack.c.h.b16 %v240
        %v456 = vunpack.c.l.b16 %v241
        %v457 = vunpack.c.h.b16 %v241
        %v458 = vunpack.c.l.b16 %v242
        %v459 = vunpack.c.h.b16 %v242
        %v460 = vunpack.c.l.b16 %v243
        %v461 = vunpack.c.h.b16 %v243
        %v462 = vunpack.c.l.b16 %v244
        %v463 = vunpack.c.h.b16 %v244
        %v464 = vunpack.c.l.b16 %v245
        %v465 = vunpack.c.h.b16 %v245
        %v466 = vunpack.c.l.b16 %v246
        %v467 = vunpack.c.h.b16 %v246
        %v468 = vunpack.c.l.b16 %v247
        %v469 = vunpack.c.h.b16 %v247
        %v470 = vunpack.c.l.b16 %v248
        %v471 = vunpack.c.h.b16 %v248
        %v472 = vunpack.c.l.b16 %v249
        %v473 = vunpack.c.h.b16 %v249
        %v474 = vunpack.c.l.b16 %v250
        %v475 = vunpack.c.h.b16 %v250
        %v476 = vunpack.c.l.b16 %v251
        %v477 = vunpack.c.h.b16 %v251
        %v478 = vunpack.c.l.b16 %v252
        %v479 = vunpack.c.h.b16 %v252
        %v480 = vunpack.c.l.b16 %v253
        %v481 = vunpack.c.h.b16 %v253
        %v482 = vunpack.c.l.b16 %v254
        %v483 = vunpack.c.h.b16 %v254
        %v484 = vunpack.c.l.b16 %v255
        %v485 = vunpack.c.h.b16 %v255
        %v486 = vunpack.c.l.b16 %v256
        %v487 = vunpack.c.h.b16 %v256
        %v488 = vunpack.c.l.b16 %v257
        %v489 = vunpack.c.h.b16 %v257
        %v490 = vunpack.c.l.b16 %v258
        %v491 = vunpack.c.h.b16 %v258
        %v492 = vunpack.c.l.b16 %v259
        %v493 = vunpack.c.h.b16 %v259
        %v494 = vunpack.c.l.b16 %v260
        %v495 = vunpack.c.h.b16 %v260
        %v496 = vunpack.c.l.b16 %v261
        %v497 = vunpack.c.h.b16 %v261
        %v498 = vunpack.c.l.b16 %v262
        %v499 = vunpack.c.h.b16 %v262
        %v500 = vunpack.c.l.b16 %v263
        %v501 = vunpack.c.h.b16 %v263
        %v502 = vunpack.c.l.b16 %v264
        %v503 = vunpack.c.h.b16 %v264
        %v504 = vunpack.c.l.b16 %v265
        %v505 = vunpack.c.h.b16 %v265
        %v506 = vunpack.c.l.b16 %v266
        %v507 = vunpack.c.h.b16 %v266
        %v508 = vunpack.c.l.b16 %v267
        %v509 = vunpack.c.h.b16 %v267
        %v510 = vunpack.c.l.b16 %v268
        %v511 = vunpack.c.h.b16 %v268
        %v512 = vunpack.c.l.b16 %v269
        %v513 = vunpack.c.h.b16 %v269
        %v514 = vunpack.c.l.b16 %v270
        %v515 = vunpack.c.h.b16 %v270
        %v516 = vunpack.c.l.b16 %v271
        %v517 = vunpack.c.h.b16 %v271
        %v518 = vunpack.c.l.b16 %v272
        %v519 = vunpack.c.h.b16 %v272
        %v520 = vunpack.c.l.b16 %v273
        %v521 = vunpack.c.h.b16 %v273
        %v522 = vunpack.c.l.b16 %v274
        %v523 = vunpack.c.h.b16 %v274
        %v524 = vunpack.c.l.b16 %v275
        %v525 = vunpack.c.h.b16 %v275
        %v526 = vunpack.c.l.b16 %v276
        %v527 = vunpack.c.h.b16 %v276
        %v528 = vunpack.c.l.b16 %v277
        %v529 = vunpack.c.h.b16 %v277
        %v530 = vunpack.c.l.b16 %v278
        %v531 = vunpack.c.h.b16 %v278
        %v532 = vunpack.c.l.b16 %v279
        %v533 = vunpack.c.h.b16 %v279
        %v534 = vunpack.c.l.b16 %v280
        %v535 = vunpack.c.h.b16 %v280
        %v536 = vunpack.c.l.b16 %v281
        %v537 = vunpack.c.h.b16 %v281
        %v538 = vunpack.c.l.b16 %v282
        %v539 = vunpack.c.h.b16 %v282
        %v540 = vunpack.c.l.b16 %v283
        %v541 = vunpack.c.h.b16 %v283
        %v542 = vunpack.c.l.b16 %v284
        %v543 = vunpack.c.h.b16 %v284
        %v544 = vunpack.c.l.b16 %v285
        %v545 = vunpack.c.h.b16 %v285
        %v546 = vunpack.c.l.b16 %v286
        %v547 = vunpack.c.h.b16 %v286
        %v548 = vunpack.c.l.b16 %v287
        %v549 = vunpack.c.h.b16 %v287
        %v550 = vunpack.c.l.b16 %v288
        %v551 = vunpack.c.h.b16 %v288
        %v552 = vunpack.c.l.b16 %v289
        %v553 = vunpack.c.h.b16 %v289
        %v554 = vunpack.c.l.b16 %v290
        %v555 = vunpack.c.h.b16 %v290
        %v556 = vunpack.c.l.b16 %v291
        %v557 = vunpack.c.h.b16 %v291
        %v558 = vunpack.c.l.b16 %v292
        %v559 = vunpack.c.h.b16 %v292
        %v560 = vunpack.c.l.b16 %v293
        %v561 = vunpack.c.h.b16 %v293
        %v562 = vunpack.c.l.b16 %v294
        %v563 = vunpack.c.h.b16 %v294
        %v564 = vunpack.c.l.b16 %v295
        %v565 = vunpack.c.h.b16 %v295
        %v566 = vunpack.c.l.b16 %v296
        %v567 = vunpack.c.h.b16 %v296
        %v568 = vunpack.c.l.b16 %v297
        %v569 = vunpack.c.h.b16 %v297
        %v570 = vunpack.c.l.b16 %v298
        %v571 = vunpack.c.h.b16 %v298
        %v572 = vunpack.c.l.b16 %v299
        %v573 = vunpack.c.h.b16 %v299
        %v574 = vunpack.c.l.b16 %v300
        %v575 = vunpack.c.h.b16 %v300
        %v576 = vunpack.c.l.b16 %v301
        %v577 = vunpack.c.h.b16 %v301
        %v578 = vpack.c.b16 %v466, %v450
        %v579 = vpack.c.b16 %v467, %v451
        %v580 = vpack.c.b16 %v468, %v452
        %v581 = vpack.c.b16 %v469, %v453
        %v582 = vpack.c.b16 %v470, %v454
        %v583 = vpack.c.b16 %v471, %v455
        %v584 = vpack.c.b16 %v472, %v456
        %v585 = vpack.c.b16 %v473, %v457
        %v586 = vpack.c.b16 %v474, %v458
        %v587 = vpack.c.b16 %v475, %v459
        %v588 = vpack.c.b16 %v476, %v460
        %v589 = vpack.c.b16 %v477, %v461
        %v590 = vpack.c.b16 %v478, %v462
        %v591 = vpack.c.b16 %v479, %v463
        %v592 = vpack.c.b16 %v480, %v464
        %v593 = vpack.c.b16 %v481, %v465
        %v594 = vpack.c.b16 %v498, %v482
        %v595 = vpack.c.b16 %v499, %v483
        %v596 = vpack.c.b16 %v500, %v484
        %v597 = vpack.c.b16 %v501, %v485
        %v598 = vpack.c.b16 %v502, %v486
        %v599 = vpack.c.b16 %v503, %v487
        %v600 = vpack.c.b16 %v504, %v488
        %v601 = vpack.c.b16 %v505, %v489
        %v602 = vpack.c.b16 %v506, %v490
        %v603 = vpack.c.b16 %v507, %v491
        %v604 = vpack.c.b16 %v508, %v492
        %v605 = vpack.c.b16 %v509, %v493
        %v606 = vpack.c.b16 %v510, %v494
        %v607 = vpack.c.b16 %v511, %v495
        %v608 = vpack.c.b16 %v512, %v496
        %v609 = vpack.c.b16 %v513, %v497
        %v610 = vpack.c.b16 %v530, %v514
        %v611 = vpack.c.b16 %v531, %v515
        %v612 = vpack.c.b16 %v532, %v516
        %v613 = vpack.c.b16 %v533, %v517
        %v614 = vpack.c.b16 %v534, %v518
        %v615 = vpack.c.b16 %v535, %v519
        %v616 = vpack.c.b16 %v536, %v520
        %v617 = vpack.c.b16 %v537, %v521
        %v618 = vpack.c.b16 %v538, %v522
        %v619 = vpack.c.b16 %v539, %v523
        %v620 = vpack.c.b16 %v540, %v524
        %v621 = vpack.c.b16 %v541, %v525
        %v622 = vpack.c.b16 %v542, %v526
        %v623 = vpack.c.b16 %v543, %v527
        %v624 = vpack.c.b16 %v544, %v528
        %v625 = vpack.c.b16 %v545, %v529
        %v626 = vpack.c.b16 %v562, %v546
        %v627 = vpack.c.b16 %v563, %v547
        %v628 = vpack.c.b16 %v564, %v548
        %v629 = vpack.c.b16 %v565, %v549
        %v630 = vpack.c.b16 %v566, %v550
        %v631 = vpack.c.b16 %v567, %v551
        %v632 = vpack.c.b16 %v568, %v552
        %v633 = vpack.c.b16 %v569, %v553
        %v634 = vpack.c.b16 %v570, %v554
        %v635 = vpack.c.b16 %v571, %v555
        %v636 = vpack.c.b16 %v572, %v556
        %v637 = vpack.c.b16 %v573, %v557
        %v638 = vpack.c.b16 %v574, %v558
        %v639 = vpack.c.b16 %v575, %v559
        %v640 = vpack.c.b16 %v576, %v560
        %v641 = vpack.c.b16 %v577, %v561
        %vm706 = vcmask 523264
        %v708 = vsel %vm706, %v237, 0
        %710 = vmatprep.subr.bf16.mxu0 0
        %711 = vmatpush1.bf16.msra.mxu0 0
        %712 = vmatprep.subr.bf16.mxu0 0
        %713 = vmatpush1.bf16.msra.mxu0 0
        %714 = vmatprep.subr.bf16.mxu0 0
        %715 = vmatpush1.bf16.msra.mxu0 0
        %716 = vmatprep.subr.bf16.mxu0 0
        %717 = vmatpush1.bf16.msra.mxu0 0
        %718 = vmatprep.subr.bf16.mxu0 %v627
        %719 = vmatpush1.bf16.msra.mxu0 %v626
        %720 = vmatprep.subr.bf16.mxu0 %v611
        %721 = vmatpush1.bf16.msra.mxu0 %v610
        %722 = vmatprep.subr.bf16.mxu0 %v595
        %723 = vmatpush1.bf16.msra.mxu0 %v594
        %724 = vmatprep.subr.bf16.mxu0 %v579
        %725 = vmatpush1.bf16.msra.mxu0 %v578
        %726 = vmatprep.subr.bf16.mxu0 0
        %727 = vmatpush2.bf16.msra.mxu0 0
        %728 = vmatprep.subr.bf16.mxu0 0
        %729 = vmatpush2.bf16.msra.mxu0 0
        %730 = vmatprep.subr.bf16.mxu0 0
        %731 = vmatpush2.bf16.msra.mxu0 0
        %732 = vmatprep.subr.bf16.mxu0 0
        %733 = vmatpush2.bf16.msra.mxu0 0
        %734 = vmatprep.subr.bf16.mxu0 0
        %735 = vmatpush2.bf16.msra.mxu0 0
        %736 = vmatprep.subr.bf16.mxu0 0
        %737 = vmatpush2.bf16.msra.mxu0 0
        %738 = vmatprep.subr.bf16.mxu0 0
        %739 = vmatpush2.bf16.msra.mxu0 0
        %740 = vmatprep.subr.bf16.mxu0 0
        %741 = vmatpush2.bf16.msra.mxu0 0
        %742 = vmatprep.mubr.bf16.mxu0 0
        %743 = vmatmul.mubr.bf16.gmra.mxu0 %v708
        %v744 = vpop.f32.mrf.mxu0
        %v745 = vadd.f32 %v309, %v744
        %v746 = vpop.f32.mrf.mxu0
        %v747 = vadd.f32 %v313, %v746
        %v748 = vpop.f32.mrf.mxu0
        %v749 = vpop.f32.mrf.mxu0
        %750 = vdwg.mxu0
        %751 = vmatprep.subr.bf16.mxu0 0
        %752 = vmatpush1.bf16.msra.mxu0 0
        %753 = vmatprep.subr.bf16.mxu0 0
        %754 = vmatpush1.bf16.msra.mxu0 0
        %755 = vmatprep.subr.bf16.mxu0 0
        %756 = vmatpush1.bf16.msra.mxu0 0
        %757 = vmatprep.subr.bf16.mxu0 0
        %758 = vmatpush1.bf16.msra.mxu0 0
        %759 = vmatprep.subr.bf16.mxu0 %v629
        %760 = vmatpush1.bf16.msra.mxu0 %v628
        %761 = vmatprep.subr.bf16.mxu0 %v613
        %762 = vmatpush1.bf16.msra.mxu0 %v612
        %763 = vmatprep.subr.bf16.mxu0 %v597
        %764 = vmatpush1.bf16.msra.mxu0 %v596
        %765 = vmatprep.subr.bf16.mxu0 %v581
        %766 = vmatpush1.bf16.msra.mxu0 %v580
        %767 = vmatprep.subr.bf16.mxu0 0
        %768 = vmatpush2.bf16.msra.mxu0 0
        %769 = vmatprep.subr.bf16.mxu0 0
        %770 = vmatpush2.bf16.msra.mxu0 0
        %771 = vmatprep.subr.bf16.mxu0 0
        %772 = vmatpush2.bf16.msra.mxu0 0
        %773 = vmatprep.subr.bf16.mxu0 0
        %774 = vmatpush2.bf16.msra.mxu0 0
        %775 = vmatprep.subr.bf16.mxu0 0
        %776 = vmatpush2.bf16.msra.mxu0 0
        %777 = vmatprep.subr.bf16.mxu0 0
        %778 = vmatpush2.bf16.msra.mxu0 0
        %779 = vmatprep.subr.bf16.mxu0 0
        %780 = vmatpush2.bf16.msra.mxu0 0
        %781 = vmatprep.subr.bf16.mxu0 0
        %782 = vmatpush2.bf16.msra.mxu0 0
        %783 = vmatprep.mubr.bf16.mxu0 0
        %784 = vmatmul.mubr.bf16.gmra.mxu0 %v708
        %v785 = vpop.f32.mrf.mxu0
        %v786 = vadd.f32 %v317, %v785
        %v787 = vpop.f32.mrf.mxu0
        %v788 = vadd.f32 %v321, %v787
        %v789 = vpop.f32.mrf.mxu0
        %v790 = vpop.f32.mrf.mxu0
        %791 = vdwg.mxu0
        %792 = vmatprep.subr.bf16.mxu0 0
        %793 = vmatpush1.bf16.msra.mxu0 0
        %794 = vmatprep.subr.bf16.mxu0 0
        %795 = vmatpush1.bf16.msra.mxu0 0
        %796 = vmatprep.subr.bf16.mxu0 0
        %797 = vmatpush1.bf16.msra.mxu0 0
        %798 = vmatprep.subr.bf16.mxu0 0
        %799 = vmatpush1.bf16.msra.mxu0 0
        %800 = vmatprep.subr.bf16.mxu0 %v631
        %801 = vmatpush1.bf16.msra.mxu0 %v630
        %802 = vmatprep.subr.bf16.mxu0 %v615
        %803 = vmatpush1.bf16.msra.mxu0 %v614
        %804 = vmatprep.subr.bf16.mxu0 %v599
        %805 = vmatpush1.bf16.msra.mxu0 %v598
        %806 = vmatprep.subr.bf16.mxu0 %v583
        %807 = vmatpush1.bf16.msra.mxu0 %v582
        %808 = vmatprep.subr.bf16.mxu0 0
        %809 = vmatpush2.bf16.msra.mxu0 0
        %810 = vmatprep.subr.bf16.mxu0 0
        %811 = vmatpush2.bf16.msra.mxu0 0
        %812 = vmatprep.subr.bf16.mxu0 0
        %813 = vmatpush2.bf16.msra.mxu0 0
        %814 = vmatprep.subr.bf16.mxu0 0
        %815 = vmatpush2.bf16.msra.mxu0 0
        %816 = vmatprep.subr.bf16.mxu0 0
        %817 = vmatpush2.bf16.msra.mxu0 0
        %818 = vmatprep.subr.bf16.mxu0 0
        %819 = vmatpush2.bf16.msra.mxu0 0
        %820 = vmatprep.subr.bf16.mxu0 0
        %821 = vmatpush2.bf16.msra.mxu0 0
        %822 = vmatprep.subr.bf16.mxu0 0
        %823 = vmatpush2.bf16.msra.mxu0 0
        %824 = vmatprep.mubr.bf16.mxu0 0
        %825 = vmatmul.mubr.bf16.gmra.mxu0 %v708
        %v826 = vpop.f32.mrf.mxu0
        %v827 = vadd.f32 %v325, %v826
        %v828 = vpop.f32.mrf.mxu0
        %v829 = vadd.f32 %v329, %v828
        %v830 = vpop.f32.mrf.mxu0
        %v831 = vpop.f32.mrf.mxu0
        %832 = vdwg.mxu0
        %833 = vmatprep.subr.bf16.mxu0 0
        %834 = vmatpush1.bf16.msra.mxu0 0
        %835 = vmatprep.subr.bf16.mxu0 0
        %836 = vmatpush1.bf16.msra.mxu0 0
        %837 = vmatprep.subr.bf16.mxu0 0
        %838 = vmatpush1.bf16.msra.mxu0 0
        %839 = vmatprep.subr.bf16.mxu0 0
        %840 = vmatpush1.bf16.msra.mxu0 0
        %841 = vmatprep.subr.bf16.mxu0 %v633
        %842 = vmatpush1.bf16.msra.mxu0 %v632
        %843 = vmatprep.subr.bf16.mxu0 %v617
        %844 = vmatpush1.bf16.msra.mxu0 %v616
        %845 = vmatprep.subr.bf16.mxu0 %v601
        %846 = vmatpush1.bf16.msra.mxu0 %v600
        %847 = vmatprep.subr.bf16.mxu0 %v585
        %848 = vmatpush1.bf16.msra.mxu0 %v584
        %849 = vmatprep.subr.bf16.mxu0 0
        %850 = vmatpush2.bf16.msra.mxu0 0
        %851 = vmatprep.subr.bf16.mxu0 0
        %852 = vmatpush2.bf16.msra.mxu0 0
        %853 = vmatprep.subr.bf16.mxu0 0
        %854 = vmatpush2.bf16.msra.mxu0 0
        %855 = vmatprep.subr.bf16.mxu0 0
        %856 = vmatpush2.bf16.msra.mxu0 0
        %857 = vmatprep.subr.bf16.mxu0 0
        %858 = vmatpush2.bf16.msra.mxu0 0
        %859 = vmatprep.subr.bf16.mxu0 0
        %860 = vmatpush2.bf16.msra.mxu0 0
        %861 = vmatprep.subr.bf16.mxu0 0
        %862 = vmatpush2.bf16.msra.mxu0 0
        %863 = vmatprep.subr.bf16.mxu0 0
        %864 = vmatpush2.bf16.msra.mxu0 0
        %865 = vmatprep.mubr.bf16.mxu0 0
        %866 = vmatmul.mubr.bf16.gmra.mxu0 %v708
        %v867 = vpop.f32.mrf.mxu0
        %v868 = vadd.f32 %v333, %v867
        %v869 = vpop.f32.mrf.mxu0
        %v870 = vadd.f32 %v337, %v869
        %v871 = vpop.f32.mrf.mxu0
        %v872 = vpop.f32.mrf.mxu0
        %873 = vdwg.mxu0
        %874 = vmatprep.subr.bf16.mxu0 0
        %875 = vmatpush1.bf16.msra.mxu0 0
        %876 = vmatprep.subr.bf16.mxu0 0
        %877 = vmatpush1.bf16.msra.mxu0 0
        %878 = vmatprep.subr.bf16.mxu0 0
        %879 = vmatpush1.bf16.msra.mxu0 0
        %880 = vmatprep.subr.bf16.mxu0 0
        %881 = vmatpush1.bf16.msra.mxu0 0
        %882 = vmatprep.subr.bf16.mxu0 %v635
        %883 = vmatpush1.bf16.msra.mxu0 %v634
        %884 = vmatprep.subr.bf16.mxu0 %v619
        %885 = vmatpush1.bf16.msra.mxu0 %v618
        %886 = vmatprep.subr.bf16.mxu0 %v603
        %887 = vmatpush1.bf16.msra.mxu0 %v602
        %888 = vmatprep.subr.bf16.mxu0 %v587
        %889 = vmatpush1.bf16.msra.mxu0 %v586
        %890 = vmatprep.subr.bf16.mxu0 0
        %891 = vmatpush2.bf16.msra.mxu0 0
        %892 = vmatprep.subr.bf16.mxu0 0
        %893 = vmatpush2.bf16.msra.mxu0 0
        %894 = vmatprep.subr.bf16.mxu0 0
        %895 = vmatpush2.bf16.msra.mxu0 0
        %896 = vmatprep.subr.bf16.mxu0 0
        %897 = vmatpush2.bf16.msra.mxu0 0
        %898 = vmatprep.subr.bf16.mxu0 0
        %899 = vmatpush2.bf16.msra.mxu0 0
        %900 = vmatprep.subr.bf16.mxu0 0
        %901 = vmatpush2.bf16.msra.mxu0 0
        %902 = vmatprep.subr.bf16.mxu0 0
        %903 = vmatpush2.bf16.msra.mxu0 0
        %904 = vmatprep.subr.bf16.mxu0 0
        %905 = vmatpush2.bf16.msra.mxu0 0
        %906 = vmatprep.mubr.bf16.mxu0 0
        %907 = vmatmul.mubr.bf16.gmra.mxu0 %v708
        %v908 = vpop.f32.mrf.mxu0
        %v909 = vadd.f32 %v341, %v908
        %v910 = vpop.f32.mrf.mxu0
        %v911 = vadd.f32 %v345, %v910
        %v912 = vpop.f32.mrf.mxu0
        %v913 = vpop.f32.mrf.mxu0
        %914 = vdwg.mxu0
        %915 = vmatprep.subr.bf16.mxu0 0
        %916 = vmatpush1.bf16.msra.mxu0 0
        %917 = vmatprep.subr.bf16.mxu0 0
        %918 = vmatpush1.bf16.msra.mxu0 0
        %919 = vmatprep.subr.bf16.mxu0 0
        %920 = vmatpush1.bf16.msra.mxu0 0
        %921 = vmatprep.subr.bf16.mxu0 0
        %922 = vmatpush1.bf16.msra.mxu0 0
        %923 = vmatprep.subr.bf16.mxu0 %v637
        %924 = vmatpush1.bf16.msra.mxu0 %v636
        %925 = vmatprep.subr.bf16.mxu0 %v621
        %926 = vmatpush1.bf16.msra.mxu0 %v620
        %927 = vmatprep.subr.bf16.mxu0 %v605
        %928 = vmatpush1.bf16.msra.mxu0 %v604
        %929 = vmatprep.subr.bf16.mxu0 %v589
        %930 = vmatpush1.bf16.msra.mxu0 %v588
        %931 = vmatprep.subr.bf16.mxu0 0
        %932 = vmatpush2.bf16.msra.mxu0 0
        %933 = vmatprep.subr.bf16.mxu0 0
        %934 = vmatpush2.bf16.msra.mxu0 0
        %935 = vmatprep.subr.bf16.mxu0 0
        %936 = vmatpush2.bf16.msra.mxu0 0
        %937 = vmatprep.subr.bf16.mxu0 0
        %938 = vmatpush2.bf16.msra.mxu0 0
        %939 = vmatprep.subr.bf16.mxu0 0
        %940 = vmatpush2.bf16.msra.mxu0 0
        %941 = vmatprep.subr.bf16.mxu0 0
        %942 = vmatpush2.bf16.msra.mxu0 0
        %943 = vmatprep.subr.bf16.mxu0 0
        %944 = vmatpush2.bf16.msra.mxu0 0
        %945 = vmatprep.subr.bf16.mxu0 0
        %946 = vmatpush2.bf16.msra.mxu0 0
        %947 = vmatprep.mubr.bf16.mxu0 0
        %948 = vmatmul.mubr.bf16.gmra.mxu0 %v708
        %v949 = vpop.f32.mrf.mxu0
        %v950 = vadd.f32 %v349, %v949
        %v951 = vpop.f32.mrf.mxu0
        %v952 = vadd.f32 %v353, %v951
        %v953 = vpop.f32.mrf.mxu0
        %v954 = vpop.f32.mrf.mxu0
        %955 = vdwg.mxu0
        %956 = vmatprep.subr.bf16.mxu0 0
        %957 = vmatpush1.bf16.msra.mxu0 0
        %958 = vmatprep.subr.bf16.mxu0 0
        %959 = vmatpush1.bf16.msra.mxu0 0
        %960 = vmatprep.subr.bf16.mxu0 0
        %961 = vmatpush1.bf16.msra.mxu0 0
        %962 = vmatprep.subr.bf16.mxu0 0
        %963 = vmatpush1.bf16.msra.mxu0 0
        %964 = vmatprep.subr.bf16.mxu0 %v639
        %965 = vmatpush1.bf16.msra.mxu0 %v638
        %966 = vmatprep.subr.bf16.mxu0 %v623
        %967 = vmatpush1.bf16.msra.mxu0 %v622
        %968 = vmatprep.subr.bf16.mxu0 %v607
        %969 = vmatpush1.bf16.msra.mxu0 %v606
        %970 = vmatprep.subr.bf16.mxu0 %v591
        %971 = vmatpush1.bf16.msra.mxu0 %v590
        %972 = vmatprep.subr.bf16.mxu0 0
        %973 = vmatpush2.bf16.msra.mxu0 0
        %974 = vmatprep.subr.bf16.mxu0 0
        %975 = vmatpush2.bf16.msra.mxu0 0
        %976 = vmatprep.subr.bf16.mxu0 0
        %977 = vmatpush2.bf16.msra.mxu0 0
        %978 = vmatprep.subr.bf16.mxu0 0
        %979 = vmatpush2.bf16.msra.mxu0 0
        %980 = vmatprep.subr.bf16.mxu0 0
        %981 = vmatpush2.bf16.msra.mxu0 0
        %982 = vmatprep.subr.bf16.mxu0 0
        %983 = vmatpush2.bf16.msra.mxu0 0
        %984 = vmatprep.subr.bf16.mxu0 0
        %985 = vmatpush2.bf16.msra.mxu0 0
        %986 = vmatprep.subr.bf16.mxu0 0
        %987 = vmatpush2.bf16.msra.mxu0 0
        %988 = vmatprep.mubr.bf16.mxu0 0
        %989 = vmatmul.mubr.bf16.gmra.mxu0 %v708
        %v990 = vpop.f32.mrf.mxu0
        %v991 = vadd.f32 %v357, %v990
        %v992 = vpop.f32.mrf.mxu0
        %v993 = vadd.f32 %v361, %v992
        %v994 = vpop.f32.mrf.mxu0
        %v995 = vpop.f32.mrf.mxu0
        %996 = vdwg.mxu0
        %997 = vmatprep.subr.bf16.mxu0 0
        %998 = vmatpush1.bf16.msra.mxu0 0
        %999 = vmatprep.subr.bf16.mxu0 0
        %1000 = vmatpush1.bf16.msra.mxu0 0
        %1001 = vmatprep.subr.bf16.mxu0 0
        %1002 = vmatpush1.bf16.msra.mxu0 0
        %1003 = vmatprep.subr.bf16.mxu0 0
        %1004 = vmatpush1.bf16.msra.mxu0 0
        %1005 = vmatprep.subr.bf16.mxu0 %v641
        %1006 = vmatpush1.bf16.msra.mxu0 %v640
        %1007 = vmatprep.subr.bf16.mxu0 %v625
        %1008 = vmatpush1.bf16.msra.mxu0 %v624
        %1009 = vmatprep.subr.bf16.mxu0 %v609
        %1010 = vmatpush1.bf16.msra.mxu0 %v608
        %1011 = vmatprep.subr.bf16.mxu0 %v593
        %1012 = vmatpush1.bf16.msra.mxu0 %v592
        %1013 = vmatprep.subr.bf16.mxu0 0
        %1014 = vmatpush2.bf16.msra.mxu0 0
        %1015 = vmatprep.subr.bf16.mxu0 0
        %1016 = vmatpush2.bf16.msra.mxu0 0
        %1017 = vmatprep.subr.bf16.mxu0 0
        %1018 = vmatpush2.bf16.msra.mxu0 0
        %1019 = vmatprep.subr.bf16.mxu0 0
        %1020 = vmatpush2.bf16.msra.mxu0 0
        %1021 = vmatprep.subr.bf16.mxu0 0
        %1022 = vmatpush2.bf16.msra.mxu0 0
        %1023 = vmatprep.subr.bf16.mxu0 0
        %1024 = vmatpush2.bf16.msra.mxu0 0
        %1025 = vmatprep.subr.bf16.mxu0 0
        %1026 = vmatpush2.bf16.msra.mxu0 0
        %1027 = vmatprep.subr.bf16.mxu0 0
        %1028 = vmatpush2.bf16.msra.mxu0 0
        %1029 = vmatprep.mubr.bf16.mxu0 0
        %1030 = vmatmul.mubr.bf16.gmra.mxu0 %v708
        %v1031 = vpop.f32.mrf.mxu0
        %v1032 = vadd.f32 %v365, %v1031
        %v1033 = vpop.f32.mrf.mxu0
        %v1034 = vadd.f32 %v369, %v1033
        %v1035 = vpop.f32.mrf.mxu0
        %v1036 = vpop.f32.mrf.mxu0
        %1037 = vdwg.mxu0
        %v1038 = vmax.f32 %v745, 0.0
        %v1039 = vmax.f32 %v747, 0.0
        %v1040 = vmax.f32 %v786, 0.0
        %v1041 = vmax.f32 %v788, 0.0
        %v1042 = vmax.f32 %v827, 0.0
        %v1043 = vmax.f32 %v829, 0.0
        %v1044 = vmax.f32 %v868, 0.0
        %v1045 = vmax.f32 %v870, 0.0
        %v1046 = vmax.f32 %v909, 0.0
        %v1047 = vmax.f32 %v911, 0.0
        %v1048 = vmax.f32 %v950, 0.0
        %v1049 = vmax.f32 %v952, 0.0
        %v1050 = vmax.f32 %v991, 0.0
        %v1051 = vmax.f32 %v993, 0.0
        %v1052 = vmax.f32 %v1032, 0.0
        %v1053 = vmax.f32 %v1034, 0.0
        %1054 = vadd.xlane.f32.xlu0 %v1038
        %v1055 = vpop.xlane.xlu0 %1054
        %v1056 = vmul.f32 %v1055, %v1046
        %1057 = vadd.xlane.f32.xlu0 %v1039
        %v1058 = vpop.xlane.xlu0 %1057
        %v1059 = vmul.f32 %v1058, %v1047
        %v1060 = vadd.f32 %v1056, %v1059
        %1061 = vadd.xlane.f32.xlu0 %v1040
        %v1062 = vpop.xlane.xlu0 %1061
        %v1063 = vmul.f32 %v1062, %v1048
        %v1064 = vadd.f32 %v1060, %v1063
        %1065 = vadd.xlane.f32.xlu0 %v1041
        %v1066 = vpop.xlane.xlu0 %1065
        %v1067 = vmul.f32 %v1066, %v1049
        %v1068 = vadd.f32 %v1064, %v1067
        %1069 = vadd.xlane.f32.xlu0 %v1042
        %v1070 = vpop.xlane.xlu0 %1069
        %v1071 = vmul.f32 %v1070, %v1050
        %v1072 = vadd.f32 %v1068, %v1071
        %1073 = vadd.xlane.f32.xlu0 %v1043
        %v1074 = vpop.xlane.xlu0 %1073
        %v1075 = vmul.f32 %v1074, %v1051
        %v1076 = vadd.f32 %v1072, %v1075
        %1077 = vadd.xlane.f32.xlu0 %v1044
        %v1078 = vpop.xlane.xlu0 %1077
        %v1079 = vmul.f32 %v1078, %v1052
        %v1080 = vadd.f32 %v1076, %v1079
        %1081 = vadd.xlane.f32.xlu0 %v1045
        %v1082 = vpop.xlane.xlu0 %1081
        %v1083 = vmul.f32 %v1082, %v1053
        %v1084 = vadd.f32 %v1080, %v1083
        %v1085 = vld [vmem:[%s3] sm:$0xff]
        %v1086 = vld [vmem:[%s3 + $0x8] sm:$0xff]
        %v1087 = vld [vmem:[%s3 + $0x10] sm:$0xff]
        %v1088 = vld [vmem:[%s3 + $0x18] sm:$0xff]
        %v1089 = vld [vmem:[%s3 + $0x20] sm:$0xff]
        %v1090 = vld [vmem:[%s3 + $0x28] sm:$0xff]
        %v1091 = vld [vmem:[%s3 + $0x30] sm:$0xff]
        %v1092 = vld [vmem:[%s3 + $0x38] sm:$0xff]
        %v1093 = vld [vmem:[%s3 + $0x40] sm:$0xff]
        %v1094 = vld [vmem:[%s3 + $0x48] sm:$0xff]
        %v1095 = vld [vmem:[%s3 + $0x50] sm:$0xff]
        %v1096 = vld [vmem:[%s3 + $0x58] sm:$0xff]
        %v1097 = vld [vmem:[%s3 + $0x60] sm:$0xff]
        %v1098 = vld [vmem:[%s3 + $0x68] sm:$0xff]
        %v1099 = vld [vmem:[%s3 + $0x70] sm:$0xff]
        %v1100 = vld [vmem:[%s3 + $0x78] sm:$0xff]
        %v1101 = vld [vmem:[%s4] sm:$0x1]
        %v1103 = vlaneseq
        %v1104 = vshrl.u32 %v1103, 7
        %v1105 = vsub.s32 0, %v1104
        %v1106 = vrot.slane %v1101, %v1105
        %1108 = vmatprep.subr.mxu0 0.0
        %1109 = vmatpush1.msra.mxu0 %v1100
        %1110 = vmatprep.subr.mxu0 0.0
        %1111 = vmatpush1.msra.mxu0 %v1099
        %1112 = vmatprep.subr.mxu0 0.0
        %1113 = vmatpush1.msra.mxu0 %v1098
        %1114 = vmatprep.subr.mxu0 0.0
        %1115 = vmatpush1.msra.mxu0 %v1097
        %1116 = vmatprep.subr.mxu0 0.0
        %1117 = vmatpush1.msra.mxu0 %v1096
        %1118 = vmatprep.subr.mxu0 0.0
        %1119 = vmatpush1.msra.mxu0 %v1095
        %1120 = vmatprep.subr.mxu0 0.0
        %1121 = vmatpush1.msra.mxu0 %v1094
        %1122 = vmatprep.subr.mxu0 0.0
        %1123 = vmatpush1.msra.mxu0 %v1093
        %1124 = vmatprep.subr.mxu0 0.0
        %1125 = vmatpush1.msra.mxu0 %v1092
        %1126 = vmatprep.subr.mxu0 0.0
        %1127 = vmatpush1.msra.mxu0 %v1091
        %1128 = vmatprep.subr.mxu0 0.0
        %1129 = vmatpush1.msra.mxu0 %v1090
        %1130 = vmatprep.subr.mxu0 0.0
        %1131 = vmatpush1.msra.mxu0 %v1089
        %1132 = vmatprep.subr.mxu0 0.0
        %1133 = vmatpush1.msra.mxu0 %v1088
        %1134 = vmatprep.subr.mxu0 0.0
        %1135 = vmatpush1.msra.mxu0 %v1087
        %1136 = vmatprep.subr.mxu0 0.0
        %1137 = vmatpush1.msra.mxu0 %v1086
        %1138 = vmatprep.subr.mxu0 0.0
        %1139 = vmatpush1.msra.mxu0 %v1085
        %1140 = vmatprep.subr.mxu0 0.0
        %1141 = vmatpush2.msra.mxu0 0.0
        %1142 = vmatprep.subr.mxu0 0.0
        %1143 = vmatpush2.msra.mxu0 0.0
        %1144 = vmatprep.subr.mxu0 0.0
        %1145 = vmatpush2.msra.mxu0 0.0
        %1146 = vmatprep.subr.mxu0 0.0
        %1147 = vmatpush2.msra.mxu0 0.0
        %1148 = vmatprep.subr.mxu0 0.0
        %1149 = vmatpush2.msra.mxu0 0.0
        %1150 = vmatprep.subr.mxu0 0.0
        %1151 = vmatpush2.msra.mxu0 0.0
        %1152 = vmatprep.subr.mxu0 0.0
        %1153 = vmatpush2.msra.mxu0 0.0
        %1154 = vmatprep.subr.mxu0 0.0
        %1155 = vmatpush2.msra.mxu0 0.0
        %1156 = vmatprep.subr.mxu0 0.0
        %1157 = vmatpush2.msra.mxu0 0.0
        %1158 = vmatprep.subr.mxu0 0.0
        %1159 = vmatpush2.msra.mxu0 0.0
        %1160 = vmatprep.subr.mxu0 0.0
        %1161 = vmatpush2.msra.mxu0 0.0
        %1162 = vmatprep.subr.mxu0 0.0
        %1163 = vmatpush2.msra.mxu0 0.0
        %1164 = vmatprep.subr.mxu0 0.0
        %1165 = vmatpush2.msra.mxu0 0.0
        %1166 = vmatprep.subr.mxu0 0.0
        %1167 = vmatpush2.msra.mxu0 0.0
        %1168 = vmatprep.subr.mxu0 0.0
        %1169 = vmatpush2.msra.mxu0 0.0
        %1170 = vmatprep.subr.mxu0 0.0
        %1171 = vmatpush2.msra.mxu0 0.0
        %1172 = vmatprep.mubr.f32.mxu0 0.0
        %1173 = vmatmul.mubr.f32.gmra.mxu0 %v1084
        %v1174 = vpop.f32.mrf.mxu0
        %v1175 = vadd.f32 %v1106, %v1174
        %v1176 = vpop.f32.mrf.mxu0
        %1177 = vdwg.mxu0
        %v1178 = vadd.f32 %v236, %v1175
        %1179 = vst.msk [vmem:[%s230] sm:$0xff] %vm706, %v1178
        %s1180 = sand.u32 %s138, 1
        %s1181 = scalar_lea.sflag [#allocation4], %s1180
        %s1182 = sand.u32 %s138, 1
        %s1183 = smul.addr %s1182, 8
        %s1184 = scalar_lea.vmem [#allocation5], %s1183
        // Predicated region
        $region45: #{tpu_custom_call.1} parent=39 // pred_check
          %p1185 = pneg %p148
        $region46: #{tpu_custom_call.1} parent=39 // pred_check_branch
          %1187 = sbr.rel (%p1185) target = $region48
        $region47: #{tpu_custom_call.1} parent=39 // pred_region
          %s1189 = ssub.s32 128, 128
          %1190 = vsyncadd %s1181, %s1189
          %s1191 = smul.addr %s20, 128
          %s1192 = scalar_lea.hbm %s5, %s1191
          %s1194 = sshll.u32 %s1184, 4
          %s1195 = int_to_ptr.vmem [resolvable:$true] %s1194
          %1197 = dma.vmem_to_hbm [thread:$0]  %s1195, 128, %s1192, %s1181
        $region48: #{tpu_custom_call.1} parent=39 // pred_fallthru
          _
      $region40: #{tpu_custom_call.1} parent=5 // pred_fallthru
        _
      %p1198 = scmp.le.s32.totalorder 2, %s15
      // Predicated region
      $region49: #{tpu_custom_call.1} parent=5 // pred_check
        %p1199 = pneg %p1198
      $region50: #{tpu_custom_call.1} parent=5 // pred_check_branch
        %1201 = sbr.rel (%p1199) target = $region52
      $region51: #{tpu_custom_call.1} parent=5 // pred_region
        %s1202 = ssub.s32 %s15, 2
        // Predicated region
        $region53: #{tpu_custom_call.1} parent=51 // pred_check
          %p1203 = pneg %p154
        $region54: #{tpu_custom_call.1} parent=51 // pred_check_branch
          %1205 = sbr.rel (%p1203) target = $region56
        $region55: #{tpu_custom_call.1} parent=51 // pred_region
          %s1206 = sand.u32 %s139, 1
          %s1207 = scalar_lea.sflag [#allocation4], %s1206
          %s1208 = sand.u32 %s139, 1
          %s1209 = smul.addr %s1208, 8
          %s1210 = scalar_lea.vmem [#allocation5], %s1209
          %1211 = dma.done %s1207, 128
        $region56: #{tpu_custom_call.1} parent=51 // pred_fallthru
          _
      $region52: #{tpu_custom_call.1} parent=5 // pred_fallthru
        _
    $region6: #{tpu_custom_call.1} parent=1 // loop_footer
      %s19 = sadd.s32 1, %s15
    $region7: #{tpu_custom_call.1} parent=1 // loop_footer_branch
      %14 = sbr.rel target = $region3
    $region8: #{tpu_custom_call.1} parent=1 // loop_exit
      _
    %1212 = vsyncpa [#allocation3], 1
    %s1213 = scalar_lea.sflag [#allocation3], 1
    %1214 = vsyncpa %s1213, 1
    %1215 = vsyncpa [#allocation4], 1
    %s1216 = scalar_lea.sflag [#allocation4], 1
    %1217 = vsyncpa %s1216, 1

</llo_original>
